<compile_context>
chip_gen: v7x
topology: tpu7x:2x2x1
jax: 0.10.0
libtpu: 0.0.40
codegen_flags: <defaults>
</compile_context>

<pallas_src>
import jax
import jax.numpy as jnp
import numpy as np
from jax import lax
from jax.experimental import pallas as pl
from jax.experimental.pallas import tpu as pltpu


_EPS = 1e-12  # matches torch.nn.functional.normalize default eps


def _round_up(x, m):
    return ((x + m - 1) // m) * m


def _mf_forward_kernel(s_ref, ids_ref, out_ref):
    # s_ref  : (num_models,) f32, SMEM   s[m] = (proj * W_cls[0]) . normalize(P[m])
    # ids_ref: (R, C) int32, VMEM        packed ids: win | (loss << 16)
    # out_ref: (R, C) f32, VMEM          logits
    num_models = s_ref.shape[0]
    packed = ids_ref[...]
    widx = packed & 0xFFFF          # winner id
    lidx = packed >> 16             # loser id (ids < 32768 => arithmetic shift exact)

    acc = jnp.zeros(out_ref.shape, jnp.float32)
    # num_models is tiny; fully unrolled VPU selects against SMEM scalars.
    # No MXU, no cross-lane reduce, no (dim x tile) intermediate.
    for m in range(num_models):
        sm = s_ref[m]
        acc = acc + jnp.where(widx == m, sm, 0.0) - jnp.where(lidx == m, sm, 0.0)
    out_ref[...] = acc


def mf_model_forward(P, W_proj, W_cls, model_win, model_loss, prompt_embed,
                     *, lane_tile=1024, row_tile=256):
    """Pallas-backed forward pass of MFModel_Train (test=True).

    P           : (num_models, dim)  embedding table
    W_proj      : (dim, text_dim)    text_proj.weight (torch Linear layout)
    W_cls       : (num_classes, dim) classifier.weight (torch Linear layout)
    model_win   : (B,) int32
    model_loss  : (B,) int32
    prompt_embed: (text_dim,) float32
    returns     : (B,) float32 (num_classes == 1 squeezed; scalar if B == 1)
    """
    num_models, dim = P.shape
    num_classes = W_cls.shape[0]
    assert num_classes == 1, "fused-classifier kernel assumes num_classes == 1"
    assert num_models <= 32768, "id packing assumes model ids fit in 15 bits"
    assert lane_tile % 128 == 0, "lane_tile must be a multiple of 128"
    assert row_tile % 8 == 0, "row_tile must be a multiple of 8"
    B = model_win.shape[0]

    # ---- batch-independent preprocessing (tiny, once per call) ---------------
    P32 = P.astype(jnp.float32)
    # rsqrt(max(sumsq, eps^2)) == 1 / max(||p||, eps)  (torch F.normalize)
    inv_norm = lax.rsqrt(jnp.maximum(jnp.sum(P32 * P32, axis=1, keepdims=True),
                                     _EPS * _EPS))
    pn = P32 * inv_norm                                            # (num_models, dim)
    proj = jnp.dot(W_proj.astype(jnp.float32),
                   prompt_embed.astype(jnp.float32),
                   precision=lax.Precision.HIGHEST)                # text_proj(prompt)
    v = proj * W_cls[0].astype(jnp.float32)                        # classifier fused
    s = jnp.dot(pn, v, precision=lax.Precision.HIGHEST)            # (num_models,)

    # ---- pack the two id streams into one int32 word (4 B/row) ---------------
    packed = ((model_win.astype(jnp.int32) & 0xFFFF)
              | (model_loss.astype(jnp.int32) << 16))

    # ---- sublane+lane dense 2-D batch layout ----------------------------------
    C = lane_tile
    rows = -(-B // C)                              # cdiv
    R = min(row_tile, _round_up(rows, 8))          # block rows: multiple of 8
    padded_rows = _round_up(rows, R)
    n_tiles = padded_rows // R
    total = padded_rows * C
    # Padded rows get win = loss = 0 -> logit 0; sliced off below.
    packed2d = jnp.pad(packed, (0, total - B)).reshape(padded_rows, C)

    out = pl.pallas_call(
        _mf_forward_kernel,
        out_shape=jax.ShapeDtypeStruct((padded_rows, C), jnp.float32),
        grid=(n_tiles,),
        in_specs=[
            pl.BlockSpec(memory_space=pltpu.MemorySpace.SMEM),   # s: tiny scalar table
            pl.BlockSpec((R, C), lambda i: (i, 0)),              # packed ids
        ],
        out_specs=pl.BlockSpec((R, C), lambda i: (i, 0)),
        compiler_params=pltpu.CompilerParams(
            dimension_semantics=("parallel",),    # shards big batches across TCs (v7x)
            vmem_limit_bytes=32 * 1024 * 1024,    # ~2 MiB/tile double-buffered; portable
        ),
    )(s, packed2d)

    return jnp.squeeze(out.reshape(-1)[:B])       # matches torch .squeeze()


def _reference_forward(P, W_proj, W_cls, model_win, model_loss, prompt_embed):
    eps = 1e-12
    win = jnp.take(P, model_win, axis=0)
    loss = jnp.take(P, model_loss, axis=0)
    win_n = win / jnp.maximum(jnp.linalg.norm(win, axis=1, keepdims=True), eps)
    loss_n = loss / jnp.maximum(jnp.linalg.norm(loss, axis=1, keepdims=True), eps)
    proj = jnp.dot(prompt_embed, W_proj.T, precision=lax.Precision.HIGHEST)
    return jnp.squeeze(jnp.dot((win_n - loss_n) * proj, W_cls.T,
                               precision=lax.Precision.HIGHEST))


if __name__ == "__main__":
    # Small shapes consistent with the module's __init__:
    # dim=64, num_models=8, text_dim=128 (stand-in for 3584), num_classes=1.
    dim, num_models, text_dim, num_classes = 64, 8, 128, 1

    key = jax.random.PRNGKey(0)
    k_p, k_proj, k_cls, k_prompt = jax.random.split(key, 4)

    P = jax.random.normal(k_p, (num_models, dim), dtype=jnp.float32)
    W_proj = jax.random.normal(k_proj, (dim, text_dim), dtype=jnp.float32) * 0.05
    W_cls = jax.random.normal(k_cls, (num_classes, dim), dtype=jnp.float32) * 0.1
    prompt_embed = jax.random.normal(k_prompt, (text_dim,), dtype=jnp.float32)

    # (B, lane_tile, row_tile):
    #   384  -> default slab, single tile
    #   5    -> padding + squeeze path
    #   4096 -> small tiles to exercise a 4-step tiled grid / index_map
    cases = [(384, 1024, 256), (5, 1024, 256), (4096, 128, 8)]
    for B, lane_tile, row_tile in cases:
        kb = jax.random.fold_in(key, B)
        kw, kl = jax.random.split(kb)
        model_win = jax.random.randint(kw, (B,), 0, num_models, dtype=jnp.int32)
        model_loss = jax.random.randint(kl, (B,), 0, num_models, dtype=jnp.int32)

        out = mf_model_forward(P, W_proj, W_cls, model_win, model_loss,
                               prompt_embed, lane_tile=lane_tile, row_tile=row_tile)
        out = jax.block_until_ready(out)

        ref = _reference_forward(P, W_proj, W_cls, model_win, model_loss,
                                 prompt_embed)
        np.testing.assert_allclose(np.asarray(out), np.asarray(ref),
                                   rtol=1e-5, atol=1e-5)

    print("KERNEL_OK")
</pallas_src>

<mosaic_0001>
module attributes {stable_mosaic.version = 11 : i64} {
  func.func @_mf_forward_kernel(%arg0: i32, %arg1: memref<8xf32, #tpu.memory_space<smem>>, %arg2: memref<8x1024xi32, #tpu.memory_space<vmem>>, %arg3: memref<8x1024xf32, #tpu.memory_space<vmem>>) attributes {dimension_semantics = [#tpu.dimension_semantics<parallel>], iteration_bounds = array<i64: 1>, scalar_prefetch = 0 : i64, scratch_operands = 0 : i64, tpu.core_type = #tpu.core_type<tc>, window_params = [{transform_indices = @transform_0, window_bounds = array<i64: 8>}, {transform_indices = @transform_1, window_bounds = array<i64: 8, 1024>}, {transform_indices = @transform_2, window_bounds = array<i64: 8, 1024>}]} {
    %c0 = arith.constant 0 : index
    %c0_0 = arith.constant 0 : index
    %0 = vector.load %arg2[%c0, %c0_0] : memref<8x1024xi32, #tpu.memory_space<vmem>>, vector<8x1024xi32>
    %c65535_i32 = arith.constant 65535 : i32
    %1 = vector.broadcast %c65535_i32 : i32 to vector<8x1024xi32>
    %2 = arith.andi %0, %1 : vector<8x1024xi32>
    %c16_i32 = arith.constant 16 : i32
    %3 = vector.broadcast %c16_i32 : i32 to vector<8x1024xi32>
    %4 = arith.shrsi %0, %3 : vector<8x1024xi32>
    %cst = arith.constant 0.000000e+00 : f32
    %5 = vector.broadcast %cst : f32 to vector<8x1024xf32>
    %c0_1 = arith.constant 0 : index
    %6 = memref.load %arg1[%c0_1] : memref<8xf32, #tpu.memory_space<smem>>
    %c0_i32 = arith.constant 0 : i32
    %7 = vector.broadcast %c0_i32 : i32 to vector<8x1024xi32>
    %8 = arith.cmpi eq, %2, %7 : vector<8x1024xi32>
    %cst_2 = arith.constant 0.000000e+00 : f32
    %9 = vector.broadcast %6 : f32 to vector<8x1024xf32>
    %10 = vector.broadcast %cst_2 : f32 to vector<8x1024xf32>
    %11 = arith.select %8, %9, %10 : vector<8x1024xi1>, vector<8x1024xf32>
    %12 = arith.addf %5, %11 : vector<8x1024xf32>
    %c0_i32_3 = arith.constant 0 : i32
    %13 = vector.broadcast %c0_i32_3 : i32 to vector<8x1024xi32>
    %14 = arith.cmpi eq, %4, %13 : vector<8x1024xi32>
    %cst_4 = arith.constant 0.000000e+00 : f32
    %15 = vector.broadcast %6 : f32 to vector<8x1024xf32>
    %16 = vector.broadcast %cst_4 : f32 to vector<8x1024xf32>
    %17 = arith.select %14, %15, %16 : vector<8x1024xi1>, vector<8x1024xf32>
    %18 = arith.subf %12, %17 : vector<8x1024xf32>
    %c1 = arith.constant 1 : index
    %19 = memref.load %arg1[%c1] : memref<8xf32, #tpu.memory_space<smem>>
    %c1_i32 = arith.constant 1 : i32
    %20 = vector.broadcast %c1_i32 : i32 to vector<8x1024xi32>
    %21 = arith.cmpi eq, %2, %20 : vector<8x1024xi32>
    %cst_5 = arith.constant 0.000000e+00 : f32
    %22 = vector.broadcast %19 : f32 to vector<8x1024xf32>
    %23 = vector.broadcast %cst_5 : f32 to vector<8x1024xf32>
    %24 = arith.select %21, %22, %23 : vector<8x1024xi1>, vector<8x1024xf32>
    %25 = arith.addf %18, %24 : vector<8x1024xf32>
    %c1_i32_6 = arith.constant 1 : i32
    %26 = vector.broadcast %c1_i32_6 : i32 to vector<8x1024xi32>
    %27 = arith.cmpi eq, %4, %26 : vector<8x1024xi32>
    %cst_7 = arith.constant 0.000000e+00 : f32
    %28 = vector.broadcast %19 : f32 to vector<8x1024xf32>
    %29 = vector.broadcast %cst_7 : f32 to vector<8x1024xf32>
    %30 = arith.select %27, %28, %29 : vector<8x1024xi1>, vector<8x1024xf32>
    %31 = arith.subf %25, %30 : vector<8x1024xf32>
    %c2 = arith.constant 2 : index
    %32 = memref.load %arg1[%c2] : memref<8xf32, #tpu.memory_space<smem>>
    %c2_i32 = arith.constant 2 : i32
    %33 = vector.broadcast %c2_i32 : i32 to vector<8x1024xi32>
    %34 = arith.cmpi eq, %2, %33 : vector<8x1024xi32>
    %cst_8 = arith.constant 0.000000e+00 : f32
    %35 = vector.broadcast %32 : f32 to vector<8x1024xf32>
    %36 = vector.broadcast %cst_8 : f32 to vector<8x1024xf32>
    %37 = arith.select %34, %35, %36 : vector<8x1024xi1>, vector<8x1024xf32>
    %38 = arith.addf %31, %37 : vector<8x1024xf32>
    %c2_i32_9 = arith.constant 2 : i32
    %39 = vector.broadcast %c2_i32_9 : i32 to vector<8x1024xi32>
    %40 = arith.cmpi eq, %4, %39 : vector<8x1024xi32>
    %cst_10 = arith.constant 0.000000e+00 : f32
    %41 = vector.broadcast %32 : f32 to vector<8x1024xf32>
    %42 = vector.broadcast %cst_10 : f32 to vector<8x1024xf32>
    %43 = arith.select %40, %41, %42 : vector<8x1024xi1>, vector<8x1024xf32>
    %44 = arith.subf %38, %43 : vector<8x1024xf32>
    %c3 = arith.constant 3 : index
    %45 = memref.load %arg1[%c3] : memref<8xf32, #tpu.memory_space<smem>>
    %c3_i32 = arith.constant 3 : i32
    %46 = vector.broadcast %c3_i32 : i32 to vector<8x1024xi32>
    %47 = arith.cmpi eq, %2, %46 : vector<8x1024xi32>
    %cst_11 = arith.constant 0.000000e+00 : f32
    %48 = vector.broadcast %45 : f32 to vector<8x1024xf32>
    %49 = vector.broadcast %cst_11 : f32 to vector<8x1024xf32>
    %50 = arith.select %47, %48, %49 : vector<8x1024xi1>, vector<8x1024xf32>
    %51 = arith.addf %44, %50 : vector<8x1024xf32>
    %c3_i32_12 = arith.constant 3 : i32
    %52 = vector.broadcast %c3_i32_12 : i32 to vector<8x1024xi32>
    %53 = arith.cmpi eq, %4, %52 : vector<8x1024xi32>
    %cst_13 = arith.constant 0.000000e+00 : f32
    %54 = vector.broadcast %45 : f32 to vector<8x1024xf32>
    %55 = vector.broadcast %cst_13 : f32 to vector<8x1024xf32>
    %56 = arith.select %53, %54, %55 : vector<8x1024xi1>, vector<8x1024xf32>
    %57 = arith.subf %51, %56 : vector<8x1024xf32>
    %c4 = arith.constant 4 : index
    %58 = memref.load %arg1[%c4] : memref<8xf32, #tpu.memory_space<smem>>
    %c4_i32 = arith.constant 4 : i32
    %59 = vector.broadcast %c4_i32 : i32 to vector<8x1024xi32>
    %60 = arith.cmpi eq, %2, %59 : vector<8x1024xi32>
    %cst_14 = arith.constant 0.000000e+00 : f32
    %61 = vector.broadcast %58 : f32 to vector<8x1024xf32>
    %62 = vector.broadcast %cst_14 : f32 to vector<8x1024xf32>
    %63 = arith.select %60, %61, %62 : vector<8x1024xi1>, vector<8x1024xf32>
    %64 = arith.addf %57, %63 : vector<8x1024xf32>
    %c4_i32_15 = arith.constant 4 : i32
    %65 = vector.broadcast %c4_i32_15 : i32 to vector<8x1024xi32>
    %66 = arith.cmpi eq, %4, %65 : vector<8x1024xi32>
    %cst_16 = arith.constant 0.000000e+00 : f32
    %67 = vector.broadcast %58 : f32 to vector<8x1024xf32>
    %68 = vector.broadcast %cst_16 : f32 to vector<8x1024xf32>
    %69 = arith.select %66, %67, %68 : vector<8x1024xi1>, vector<8x1024xf32>
    %70 = arith.subf %64, %69 : vector<8x1024xf32>
    %c5 = arith.constant 5 : index
    %71 = memref.load %arg1[%c5] : memref<8xf32, #tpu.memory_space<smem>>
    %c5_i32 = arith.constant 5 : i32
    %72 = vector.broadcast %c5_i32 : i32 to vector<8x1024xi32>
    %73 = arith.cmpi eq, %2, %72 : vector<8x1024xi32>
    %cst_17 = arith.constant 0.000000e+00 : f32
    %74 = vector.broadcast %71 : f32 to vector<8x1024xf32>
    %75 = vector.broadcast %cst_17 : f32 to vector<8x1024xf32>
    %76 = arith.select %73, %74, %75 : vector<8x1024xi1>, vector<8x1024xf32>
    %77 = arith.addf %70, %76 : vector<8x1024xf32>
    %c5_i32_18 = arith.constant 5 : i32
    %78 = vector.broadcast %c5_i32_18 : i32 to vector<8x1024xi32>
    %79 = arith.cmpi eq, %4, %78 : vector<8x1024xi32>
    %cst_19 = arith.constant 0.000000e+00 : f32
    %80 = vector.broadcast %71 : f32 to vector<8x1024xf32>
    %81 = vector.broadcast %cst_19 : f32 to vector<8x1024xf32>
    %82 = arith.select %79, %80, %81 : vector<8x1024xi1>, vector<8x1024xf32>
    %83 = arith.subf %77, %82 : vector<8x1024xf32>
    %c6 = arith.constant 6 : index
    %84 = memref.load %arg1[%c6] : memref<8xf32, #tpu.memory_space<smem>>
    %c6_i32 = arith.constant 6 : i32
    %85 = vector.broadcast %c6_i32 : i32 to vector<8x1024xi32>
    %86 = arith.cmpi eq, %2, %85 : vector<8x1024xi32>
    %cst_20 = arith.constant 0.000000e+00 : f32
    %87 = vector.broadcast %84 : f32 to vector<8x1024xf32>
    %88 = vector.broadcast %cst_20 : f32 to vector<8x1024xf32>
    %89 = arith.select %86, %87, %88 : vector<8x1024xi1>, vector<8x1024xf32>
    %90 = arith.addf %83, %89 : vector<8x1024xf32>
    %c6_i32_21 = arith.constant 6 : i32
    %91 = vector.broadcast %c6_i32_21 : i32 to vector<8x1024xi32>
    %92 = arith.cmpi eq, %4, %91 : vector<8x1024xi32>
    %cst_22 = arith.constant 0.000000e+00 : f32
    %93 = vector.broadcast %84 : f32 to vector<8x1024xf32>
    %94 = vector.broadcast %cst_22 : f32 to vector<8x1024xf32>
    %95 = arith.select %92, %93, %94 : vector<8x1024xi1>, vector<8x1024xf32>
    %96 = arith.subf %90, %95 : vector<8x1024xf32>
    %c7 = arith.constant 7 : index
    %97 = memref.load %arg1[%c7] : memref<8xf32, #tpu.memory_space<smem>>
    %c7_i32 = arith.constant 7 : i32
    %98 = vector.broadcast %c7_i32 : i32 to vector<8x1024xi32>
    %99 = arith.cmpi eq, %2, %98 : vector<8x1024xi32>
    %cst_23 = arith.constant 0.000000e+00 : f32
    %100 = vector.broadcast %97 : f32 to vector<8x1024xf32>
    %101 = vector.broadcast %cst_23 : f32 to vector<8x1024xf32>
    %102 = arith.select %99, %100, %101 : vector<8x1024xi1>, vector<8x1024xf32>
    %103 = arith.addf %96, %102 : vector<8x1024xf32>
    %c7_i32_24 = arith.constant 7 : i32
    %104 = vector.broadcast %c7_i32_24 : i32 to vector<8x1024xi32>
    %105 = arith.cmpi eq, %4, %104 : vector<8x1024xi32>
    %cst_25 = arith.constant 0.000000e+00 : f32
    %106 = vector.broadcast %97 : f32 to vector<8x1024xf32>
    %107 = vector.broadcast %cst_25 : f32 to vector<8x1024xf32>
    %108 = arith.select %105, %106, %107 : vector<8x1024xi1>, vector<8x1024xf32>
    %109 = arith.subf %103, %108 : vector<8x1024xf32>
    %c0_26 = arith.constant 0 : index
    %c0_27 = arith.constant 0 : index
    %110 = vector.load %arg3[%c0_26, %c0_27] : memref<8x1024xf32, #tpu.memory_space<vmem>>, vector<8x1024xf32>
    tpu.vector_store %arg3[%c0_26, %c0_27], %109 {strides = array<i32>} : memref<8x1024xf32, #tpu.memory_space<vmem>>, vector<8x1024xf32>,
    return
  }
  func.func @transform_0(%arg0: i32) -> i32 {
    %c0_i32 = arith.constant 0 : i32
    %c0_i32_0 = arith.constant 0 : i32
    return %c0_i32 : i32
  }
  func.func @transform_1(%arg0: i32) -> (i32, i32) {
    %c0_i32 = arith.constant 0 : i32
    %c0_i32_0 = arith.constant 0 : i32
    return %arg0, %c0_i32 : i32, i32
  }
  func.func @transform_2(%arg0: i32) -> (i32, i32) {
    %c0_i32 = arith.constant 0 : i32
    %c0_i32_0 = arith.constant 0 : i32
    return %arg0, %c0_i32 : i32, i32
  }
}

</mosaic_0001>

<llo_original>
// kernel: tpu_custom_call.1
$region0: #{tpu_custom_call.1}
  #allocation0 [shape = 'u32[]', space=smem, size = 0x4, offset = 0x4, fixed_abs, tag = 'smem constant byte address 0x4 - core index']
  #allocation1 [shape = 'u32[144,128]{1,0:T(1,128)}', space=vmem, size = 0x12000, scoped, tag = 'internal scratch']
  %s0 = inlined_call_operand.hbm [shape: f32[8], index: 0, kind: input, shape index: {}]
  %s1 = inlined_call_operand.hbm [shape: s32[8,1024], index: 1, kind: input, shape index: {}]
  %s2 = inlined_call_operand.hbm [shape: f32[8,1024], index: 2, kind: output, shape index: {}]
  %s3 = sld [smem:[#allocation0]]
  $region26: #{tpu_custom_call.1} parent=0
    _
  %s5 = ssub.s32 1, %s3
  %s6 = scalar_select 0, %s5, %s3
  $region1: #{tpu_custom_call.1} parent=0
    #allocation2 [shape = 'u8[512]{0}', space=smem, size = 0x200, scoped, tag = 'input window, operand 0, single buffered']
    #allocation3 [shape = 's32[1]{0}', space=sflag, size = 0x4, scoped, tag = 'scoped memory for tpu_custom_call.1']
    #allocation4 [shape = 's32[1]{0}', space=sflag, size = 0x4, scoped, tag = 'scoped memory for tpu_custom_call.1']
    #allocation5 [shape = 's32[1]{0}', space=sflag, size = 0x4, scoped, tag = 'scoped memory for tpu_custom_call.1']
    #allocation6 [shape = 'u8[32768]{0}', space=vmem, size = 0x8000, scoped, tag = 'input window, operand 1, single buffered']
    #allocation7 [shape = 'u8[32768]{0}', space=vmem, size = 0x8000, scoped, tag = 'output window, operand 0, single buffered']
    %7 = vsyncpa [#allocation5], 0
    %8 = vsyncpa [#allocation3], 0
    %9 = vsyncpa [#allocation4], 0
    // Predicated region
    $region2: #{tpu_custom_call.1} parent=1 // pred_check
      _
    $region3: #{tpu_custom_call.1} parent=1 // pred_check_branch
      %11 = sbr.rel (0) target = $region5
    $region4: #{tpu_custom_call.1} parent=1 // pred_region
      %s13 = ssub.s32 16, 16
      %14 = vsyncadd [#allocation5], %s13
      %17 = dma.hbm_to_smem %s0, 16, [#allocation2], [#allocation5]
    $region5: #{tpu_custom_call.1} parent=1 // pred_fallthru
      _
    // Predicated region
    $region6: #{tpu_custom_call.1} parent=1 // pred_check
      _
    $region7: #{tpu_custom_call.1} parent=1 // pred_check_branch
      %19 = sbr.rel (0) target = $region9
    $region8: #{tpu_custom_call.1} parent=1 // pred_region
      %s21 = ssub.s32 1024, 1024
      %22 = vsyncadd [#allocation3], %s21
      %s24 = sshll.u32 [#allocation6], 4
      %s25 = int_to_ptr.vmem [resolvable:$true] %s24
      %27 = dma.hbm_to_vmem [thread:$0]  %s1, 1024, %s25, [#allocation3]
    $region9: #{tpu_custom_call.1} parent=1 // pred_fallthru
      _
    // Predicated region
    $region10: #{tpu_custom_call.1} parent=1 // pred_check
      _
    $region11: #{tpu_custom_call.1} parent=1 // pred_check_branch
      %29 = sbr.rel (0) target = $region13
    $region12: #{tpu_custom_call.1} parent=1 // pred_region
      %30 = dma.done [#allocation5], 16
    $region13: #{tpu_custom_call.1} parent=1 // pred_fallthru
      _
    // Predicated region
    $region14: #{tpu_custom_call.1} parent=1 // pred_check
      _
    $region15: #{tpu_custom_call.1} parent=1 // pred_check_branch
      %32 = sbr.rel (0) target = $region17
    $region16: #{tpu_custom_call.1} parent=1 // pred_region
      %33 = dma.done [#allocation3], 1024
    $region17: #{tpu_custom_call.1} parent=1 // pred_fallthru
      _
    %34 = sfence
    %v35 = vld [vmem:[#allocation6] sm:$0xff]
    %v36 = vld [vmem:[#allocation6 + $0x8] sm:$0xff]
    %v37 = vld [vmem:[#allocation6 + $0x10] sm:$0xff]
    %v38 = vld [vmem:[#allocation6 + $0x18] sm:$0xff]
    %v39 = vld [vmem:[#allocation6 + $0x20] sm:$0xff]
    %v40 = vld [vmem:[#allocation6 + $0x28] sm:$0xff]
    %v41 = vld [vmem:[#allocation6 + $0x30] sm:$0xff]
    %v42 = vld [vmem:[#allocation6 + $0x38] sm:$0xff]
    %v43 = vand.u32 %v35, 65535
    %v44 = vand.u32 %v36, 65535
    %v45 = vand.u32 %v37, 65535
    %v46 = vand.u32 %v38, 65535
    %v47 = vand.u32 %v39, 65535
    %v48 = vand.u32 %v40, 65535
    %v49 = vand.u32 %v41, 65535
    %v50 = vand.u32 %v42, 65535
    %v51 = vshra.s32 %v35, 16
    %v52 = vshra.s32 %v36, 16
    %v53 = vshra.s32 %v37, 16
    %v54 = vshra.s32 %v38, 16
    %v55 = vshra.s32 %v39, 16
    %v56 = vshra.s32 %v40, 16
    %v57 = vshra.s32 %v41, 16
    %v58 = vshra.s32 %v42, 16
    %s59 = sld [smem:[#allocation2]]
    %vm60 = vcmp.eq.s32.totalorder %v43, 0
    %vm61 = vcmp.eq.s32.totalorder %v44, 0
    %vm62 = vcmp.eq.s32.totalorder %v45, 0
    %vm63 = vcmp.eq.s32.totalorder %v46, 0
    %vm64 = vcmp.eq.s32.totalorder %v47, 0
    %vm65 = vcmp.eq.s32.totalorder %v48, 0
    %vm66 = vcmp.eq.s32.totalorder %v49, 0
    %vm67 = vcmp.eq.s32.totalorder %v50, 0
    %v68 = vstv %s59
    %v69 = vsel %vm60, %v68, 0.0
    %v70 = vsel %vm61, %v68, 0.0
    %v71 = vsel %vm62, %v68, 0.0
    %v72 = vsel %vm63, %v68, 0.0
    %v73 = vsel %vm64, %v68, 0.0
    %v74 = vsel %vm65, %v68, 0.0
    %v75 = vsel %vm66, %v68, 0.0
    %v76 = vsel %vm67, %v68, 0.0
    %v77 = vadd.f32 %v69, 0.0
    %v78 = vadd.f32 %v70, 0.0
    %v79 = vadd.f32 %v71, 0.0
    %v80 = vadd.f32 %v72, 0.0
    %v81 = vadd.f32 %v73, 0.0
    %v82 = vadd.f32 %v74, 0.0
    %v83 = vadd.f32 %v75, 0.0
    %v84 = vadd.f32 %v76, 0.0
    %vm85 = vcmp.eq.s32.totalorder %v51, 0
    %vm86 = vcmp.eq.s32.totalorder %v52, 0
    %vm87 = vcmp.eq.s32.totalorder %v53, 0
    %vm88 = vcmp.eq.s32.totalorder %v54, 0
    %vm89 = vcmp.eq.s32.totalorder %v55, 0
    %vm90 = vcmp.eq.s32.totalorder %v56, 0
    %vm91 = vcmp.eq.s32.totalorder %v57, 0
    %vm92 = vcmp.eq.s32.totalorder %v58, 0
    %v93 = vsel %vm85, %v68, 0.0
    %v94 = vsel %vm86, %v68, 0.0
    %v95 = vsel %vm87, %v68, 0.0
    %v96 = vsel %vm88, %v68, 0.0
    %v97 = vsel %vm89, %v68, 0.0
    %v98 = vsel %vm90, %v68, 0.0
    %v99 = vsel %vm91, %v68, 0.0
    %v100 = vsel %vm92, %v68, 0.0
    %v101 = vsub.f32 %v77, %v93
    %v102 = vsub.f32 %v78, %v94
    %v103 = vsub.f32 %v79, %v95
    %v104 = vsub.f32 %v80, %v96
    %v105 = vsub.f32 %v81, %v97
    %v106 = vsub.f32 %v82, %v98
    %v107 = vsub.f32 %v83, %v99
    %v108 = vsub.f32 %v84, %v100
    %s109 = sld [smem:[#allocation2 + $0x1]]
    %vm110 = vcmp.eq.s32.totalorder %v43, 1
    %vm111 = vcmp.eq.s32.totalorder %v44, 1
    %vm112 = vcmp.eq.s32.totalorder %v45, 1
    %vm113 = vcmp.eq.s32.totalorder %v46, 1
    %vm114 = vcmp.eq.s32.totalorder %v47, 1
    %vm115 = vcmp.eq.s32.totalorder %v48, 1
    %vm116 = vcmp.eq.s32.totalorder %v49, 1
    %vm117 = vcmp.eq.s32.totalorder %v50, 1
    %v118 = vstv %s109
    %v119 = vsel %vm110, %v118, 0.0
    %v120 = vsel %vm111, %v118, 0.0
    %v121 = vsel %vm112, %v118, 0.0
    %v122 = vsel %vm113, %v118, 0.0
    %v123 = vsel %vm114, %v118, 0.0
    %v124 = vsel %vm115, %v118, 0.0
    %v125 = vsel %vm116, %v118, 0.0
    %v126 = vsel %vm117, %v118, 0.0
    %v127 = vadd.f32 %v101, %v119
    %v128 = vadd.f32 %v102, %v120
    %v129 = vadd.f32 %v103, %v121
    %v130 = vadd.f32 %v104, %v122
    %v131 = vadd.f32 %v105, %v123
    %v132 = vadd.f32 %v106, %v124
    %v133 = vadd.f32 %v107, %v125
    %v134 = vadd.f32 %v108, %v126
    %vm135 = vcmp.eq.s32.totalorder %v51, 1
    %vm136 = vcmp.eq.s32.totalorder %v52, 1
    %vm137 = vcmp.eq.s32.totalorder %v53, 1
    %vm138 = vcmp.eq.s32.totalorder %v54, 1
    %vm139 = vcmp.eq.s32.totalorder %v55, 1
    %vm140 = vcmp.eq.s32.totalorder %v56, 1
    %vm141 = vcmp.eq.s32.totalorder %v57, 1
    %vm142 = vcmp.eq.s32.totalorder %v58, 1
    %v143 = vsel %vm135, %v118, 0.0
    %v144 = vsel %vm136, %v118, 0.0
    %v145 = vsel %vm137, %v118, 0.0
    %v146 = vsel %vm138, %v118, 0.0
    %v147 = vsel %vm139, %v118, 0.0
    %v148 = vsel %vm140, %v118, 0.0
    %v149 = vsel %vm141, %v118, 0.0
    %v150 = vsel %vm142, %v118, 0.0
    %v151 = vsub.f32 %v127, %v143
    %v152 = vsub.f32 %v128, %v144
    %v153 = vsub.f32 %v129, %v145
    %v154 = vsub.f32 %v130, %v146
    %v155 = vsub.f32 %v131, %v147
    %v156 = vsub.f32 %v132, %v148
    %v157 = vsub.f32 %v133, %v149
    %v158 = vsub.f32 %v134, %v150
    %s159 = sld [smem:[#allocation2 + $0x2]]
    %vm160 = vcmp.eq.s32.totalorder %v43, 2
    %vm161 = vcmp.eq.s32.totalorder %v44, 2
    %vm162 = vcmp.eq.s32.totalorder %v45, 2
    %vm163 = vcmp.eq.s32.totalorder %v46, 2
    %vm164 = vcmp.eq.s32.totalorder %v47, 2
    %vm165 = vcmp.eq.s32.totalorder %v48, 2
    %vm166 = vcmp.eq.s32.totalorder %v49, 2
    %vm167 = vcmp.eq.s32.totalorder %v50, 2
    %v168 = vstv %s159
    %v169 = vsel %vm160, %v168, 0.0
    %v170 = vsel %vm161, %v168, 0.0
    %v171 = vsel %vm162, %v168, 0.0
    %v172 = vsel %vm163, %v168, 0.0
    %v173 = vsel %vm164, %v168, 0.0
    %v174 = vsel %vm165, %v168, 0.0
    %v175 = vsel %vm166, %v168, 0.0
    %v176 = vsel %vm167, %v168, 0.0
    %v177 = vadd.f32 %v151, %v169
    %v178 = vadd.f32 %v152, %v170
    %v179 = vadd.f32 %v153, %v171
    %v180 = vadd.f32 %v154, %v172
    %v181 = vadd.f32 %v155, %v173
    %v182 = vadd.f32 %v156, %v174
    %v183 = vadd.f32 %v157, %v175
    %v184 = vadd.f32 %v158, %v176
    %vm185 = vcmp.eq.s32.totalorder %v51, 2
    %vm186 = vcmp.eq.s32.totalorder %v52, 2
    %vm187 = vcmp.eq.s32.totalorder %v53, 2
    %vm188 = vcmp.eq.s32.totalorder %v54, 2
    %vm189 = vcmp.eq.s32.totalorder %v55, 2
    %vm190 = vcmp.eq.s32.totalorder %v56, 2
    %vm191 = vcmp.eq.s32.totalorder %v57, 2
    %vm192 = vcmp.eq.s32.totalorder %v58, 2
    %v193 = vsel %vm185, %v168, 0.0
    %v194 = vsel %vm186, %v168, 0.0
    %v195 = vsel %vm187, %v168, 0.0
    %v196 = vsel %vm188, %v168, 0.0
    %v197 = vsel %vm189, %v168, 0.0
    %v198 = vsel %vm190, %v168, 0.0
    %v199 = vsel %vm191, %v168, 0.0
    %v200 = vsel %vm192, %v168, 0.0
    %v201 = vsub.f32 %v177, %v193
    %v202 = vsub.f32 %v178, %v194
    %v203 = vsub.f32 %v179, %v195
    %v204 = vsub.f32 %v180, %v196
    %v205 = vsub.f32 %v181, %v197
    %v206 = vsub.f32 %v182, %v198
    %v207 = vsub.f32 %v183, %v199
    %v208 = vsub.f32 %v184, %v200
    %s209 = sld [smem:[#allocation2 + $0x3]]
    %vm210 = vcmp.eq.s32.totalorder %v43, 3
    %vm211 = vcmp.eq.s32.totalorder %v44, 3
    %vm212 = vcmp.eq.s32.totalorder %v45, 3
    %vm213 = vcmp.eq.s32.totalorder %v46, 3
    %vm214 = vcmp.eq.s32.totalorder %v47, 3
    %vm215 = vcmp.eq.s32.totalorder %v48, 3
    %vm216 = vcmp.eq.s32.totalorder %v49, 3
    %vm217 = vcmp.eq.s32.totalorder %v50, 3
    %v218 = vstv %s209
    %v219 = vsel %vm210, %v218, 0.0
    %v220 = vsel %vm211, %v218, 0.0
    %v221 = vsel %vm212, %v218, 0.0
    %v222 = vsel %vm213, %v218, 0.0
    %v223 = vsel %vm214, %v218, 0.0
    %v224 = vsel %vm215, %v218, 0.0
    %v225 = vsel %vm216, %v218, 0.0
    %v226 = vsel %vm217, %v218, 0.0
    %v227 = vadd.f32 %v201, %v219
    %v228 = vadd.f32 %v202, %v220
    %v229 = vadd.f32 %v203, %v221
    %v230 = vadd.f32 %v204, %v222
    %v231 = vadd.f32 %v205, %v223
    %v232 = vadd.f32 %v206, %v224
    %v233 = vadd.f32 %v207, %v225
    %v234 = vadd.f32 %v208, %v226
    %vm235 = vcmp.eq.s32.totalorder %v51, 3
    %vm236 = vcmp.eq.s32.totalorder %v52, 3
    %vm237 = vcmp.eq.s32.totalorder %v53, 3
    %vm238 = vcmp.eq.s32.totalorder %v54, 3
    %vm239 = vcmp.eq.s32.totalorder %v55, 3
    %vm240 = vcmp.eq.s32.totalorder %v56, 3
    %vm241 = vcmp.eq.s32.totalorder %v57, 3
    %vm242 = vcmp.eq.s32.totalorder %v58, 3
    %v243 = vsel %vm235, %v218, 0.0
    %v244 = vsel %vm236, %v218, 0.0
    %v245 = vsel %vm237, %v218, 0.0
    %v246 = vsel %vm238, %v218, 0.0
    %v247 = vsel %vm239, %v218, 0.0
    %v248 = vsel %vm240, %v218, 0.0
    %v249 = vsel %vm241, %v218, 0.0
    %v250 = vsel %vm242, %v218, 0.0
    %v251 = vsub.f32 %v227, %v243
    %v252 = vsub.f32 %v228, %v244
    %v253 = vsub.f32 %v229, %v245
    %v254 = vsub.f32 %v230, %v246
    %v255 = vsub.f32 %v231, %v247
    %v256 = vsub.f32 %v232, %v248
    %v257 = vsub.f32 %v233, %v249
    %v258 = vsub.f32 %v234, %v250
    %s259 = sld [smem:[#allocation2 + $0x4]]
    %vm260 = vcmp.eq.s32.totalorder %v43, 4
    %vm261 = vcmp.eq.s32.totalorder %v44, 4
    %vm262 = vcmp.eq.s32.totalorder %v45, 4
    %vm263 = vcmp.eq.s32.totalorder %v46, 4
    %vm264 = vcmp.eq.s32.totalorder %v47, 4
    %vm265 = vcmp.eq.s32.totalorder %v48, 4
    %vm266 = vcmp.eq.s32.totalorder %v49, 4
    %vm267 = vcmp.eq.s32.totalorder %v50, 4
    %v268 = vstv %s259
    %v269 = vsel %vm260, %v268, 0.0
    %v270 = vsel %vm261, %v268, 0.0
    %v271 = vsel %vm262, %v268, 0.0
    %v272 = vsel %vm263, %v268, 0.0
    %v273 = vsel %vm264, %v268, 0.0
    %v274 = vsel %vm265, %v268, 0.0
    %v275 = vsel %vm266, %v268, 0.0
    %v276 = vsel %vm267, %v268, 0.0
    %v277 = vadd.f32 %v251, %v269
    %v278 = vadd.f32 %v252, %v270
    %v279 = vadd.f32 %v253, %v271
    %v280 = vadd.f32 %v254, %v272
    %v281 = vadd.f32 %v255, %v273
    %v282 = vadd.f32 %v256, %v274
    %v283 = vadd.f32 %v257, %v275
    %v284 = vadd.f32 %v258, %v276
    %vm285 = vcmp.eq.s32.totalorder %v51, 4
    %vm286 = vcmp.eq.s32.totalorder %v52, 4
    %vm287 = vcmp.eq.s32.totalorder %v53, 4
    %vm288 = vcmp.eq.s32.totalorder %v54, 4
    %vm289 = vcmp.eq.s32.totalorder %v55, 4
    %vm290 = vcmp.eq.s32.totalorder %v56, 4
    %vm291 = vcmp.eq.s32.totalorder %v57, 4
    %vm292 = vcmp.eq.s32.totalorder %v58, 4
    %v293 = vsel %vm285, %v268, 0.0
    %v294 = vsel %vm286, %v268, 0.0
    %v295 = vsel %vm287, %v268, 0.0
    %v296 = vsel %vm288, %v268, 0.0
    %v297 = vsel %vm289, %v268, 0.0
    %v298 = vsel %vm290, %v268, 0.0
    %v299 = vsel %vm291, %v268, 0.0
    %v300 = vsel %vm292, %v268, 0.0
    %v301 = vsub.f32 %v277, %v293
    %v302 = vsub.f32 %v278, %v294
    %v303 = vsub.f32 %v279, %v295
    %v304 = vsub.f32 %v280, %v296
    %v305 = vsub.f32 %v281, %v297
    %v306 = vsub.f32 %v282, %v298
    %v307 = vsub.f32 %v283, %v299
    %v308 = vsub.f32 %v284, %v300
    %s309 = sld [smem:[#allocation2 + $0x5]]
    %vm310 = vcmp.eq.s32.totalorder %v43, 5
    %vm311 = vcmp.eq.s32.totalorder %v44, 5
    %vm312 = vcmp.eq.s32.totalorder %v45, 5
    %vm313 = vcmp.eq.s32.totalorder %v46, 5
    %vm314 = vcmp.eq.s32.totalorder %v47, 5
    %vm315 = vcmp.eq.s32.totalorder %v48, 5
    %vm316 = vcmp.eq.s32.totalorder %v49, 5
    %vm317 = vcmp.eq.s32.totalorder %v50, 5
    %v318 = vstv %s309
    %v319 = vsel %vm310, %v318, 0.0
    %v320 = vsel %vm311, %v318, 0.0
    %v321 = vsel %vm312, %v318, 0.0
    %v322 = vsel %vm313, %v318, 0.0
    %v323 = vsel %vm314, %v318, 0.0
    %v324 = vsel %vm315, %v318, 0.0
    %v325 = vsel %vm316, %v318, 0.0
    %v326 = vsel %vm317, %v318, 0.0
    %v327 = vadd.f32 %v301, %v319
    %v328 = vadd.f32 %v302, %v320
    %v329 = vadd.f32 %v303, %v321
    %v330 = vadd.f32 %v304, %v322
    %v331 = vadd.f32 %v305, %v323
    %v332 = vadd.f32 %v306, %v324
    %v333 = vadd.f32 %v307, %v325
    %v334 = vadd.f32 %v308, %v326
    %vm335 = vcmp.eq.s32.totalorder %v51, 5
    %vm336 = vcmp.eq.s32.totalorder %v52, 5
    %vm337 = vcmp.eq.s32.totalorder %v53, 5
    %vm338 = vcmp.eq.s32.totalorder %v54, 5
    %vm339 = vcmp.eq.s32.totalorder %v55, 5
    %vm340 = vcmp.eq.s32.totalorder %v56, 5
    %vm341 = vcmp.eq.s32.totalorder %v57, 5
    %vm342 = vcmp.eq.s32.totalorder %v58, 5
    %v343 = vsel %vm335, %v318, 0.0
    %v344 = vsel %vm336, %v318, 0.0
    %v345 = vsel %vm337, %v318, 0.0
    %v346 = vsel %vm338, %v318, 0.0
    %v347 = vsel %vm339, %v318, 0.0
    %v348 = vsel %vm340, %v318, 0.0
    %v349 = vsel %vm341, %v318, 0.0
    %v350 = vsel %vm342, %v318, 0.0
    %v351 = vsub.f32 %v327, %v343
    %v352 = vsub.f32 %v328, %v344
    %v353 = vsub.f32 %v329, %v345
    %v354 = vsub.f32 %v330, %v346
    %v355 = vsub.f32 %v331, %v347
    %v356 = vsub.f32 %v332, %v348
    %v357 = vsub.f32 %v333, %v349
    %v358 = vsub.f32 %v334, %v350
    %s359 = sld [smem:[#allocation2 + $0x6]]
    %vm360 = vcmp.eq.s32.totalorder %v43, 6
    %vm361 = vcmp.eq.s32.totalorder %v44, 6
    %vm362 = vcmp.eq.s32.totalorder %v45, 6
    %vm363 = vcmp.eq.s32.totalorder %v46, 6
    %vm364 = vcmp.eq.s32.totalorder %v47, 6
    %vm365 = vcmp.eq.s32.totalorder %v48, 6
    %vm366 = vcmp.eq.s32.totalorder %v49, 6
    %vm367 = vcmp.eq.s32.totalorder %v50, 6
    %v368 = vstv %s359
    %v369 = vsel %vm360, %v368, 0.0
    %v370 = vsel %vm361, %v368, 0.0
    %v371 = vsel %vm362, %v368, 0.0
    %v372 = vsel %vm363, %v368, 0.0
    %v373 = vsel %vm364, %v368, 0.0
    %v374 = vsel %vm365, %v368, 0.0
    %v375 = vsel %vm366, %v368, 0.0
    %v376 = vsel %vm367, %v368, 0.0
    %v377 = vadd.f32 %v351, %v369
    %v378 = vadd.f32 %v352, %v370
    %v379 = vadd.f32 %v353, %v371
    %v380 = vadd.f32 %v354, %v372
    %v381 = vadd.f32 %v355, %v373
    %v382 = vadd.f32 %v356, %v374
    %v383 = vadd.f32 %v357, %v375
    %v384 = vadd.f32 %v358, %v376
    %vm385 = vcmp.eq.s32.totalorder %v51, 6
    %vm386 = vcmp.eq.s32.totalorder %v52, 6
    %vm387 = vcmp.eq.s32.totalorder %v53, 6
    %vm388 = vcmp.eq.s32.totalorder %v54, 6
    %vm389 = vcmp.eq.s32.totalorder %v55, 6
    %vm390 = vcmp.eq.s32.totalorder %v56, 6
    %vm391 = vcmp.eq.s32.totalorder %v57, 6
    %vm392 = vcmp.eq.s32.totalorder %v58, 6
    %v393 = vsel %vm385, %v368, 0.0
    %v394 = vsel %vm386, %v368, 0.0
    %v395 = vsel %vm387, %v368, 0.0
    %v396 = vsel %vm388, %v368, 0.0
    %v397 = vsel %vm389, %v368, 0.0
    %v398 = vsel %vm390, %v368, 0.0
    %v399 = vsel %vm391, %v368, 0.0
    %v400 = vsel %vm392, %v368, 0.0
    %v401 = vsub.f32 %v377, %v393
    %v402 = vsub.f32 %v378, %v394
    %v403 = vsub.f32 %v379, %v395
    %v404 = vsub.f32 %v380, %v396
    %v405 = vsub.f32 %v381, %v397
    %v406 = vsub.f32 %v382, %v398
    %v407 = vsub.f32 %v383, %v399
    %v408 = vsub.f32 %v384, %v400
    %s409 = sld [smem:[#allocation2 + $0x7]]
    %vm410 = vcmp.eq.s32.totalorder %v43, 7
    %vm411 = vcmp.eq.s32.totalorder %v44, 7
    %vm412 = vcmp.eq.s32.totalorder %v45, 7
    %vm413 = vcmp.eq.s32.totalorder %v46, 7
    %vm414 = vcmp.eq.s32.totalorder %v47, 7
    %vm415 = vcmp.eq.s32.totalorder %v48, 7
    %vm416 = vcmp.eq.s32.totalorder %v49, 7
    %vm417 = vcmp.eq.s32.totalorder %v50, 7
    %v418 = vstv %s409
    %v419 = vsel %vm410, %v418, 0.0
    %v420 = vsel %vm411, %v418, 0.0
    %v421 = vsel %vm412, %v418, 0.0
    %v422 = vsel %vm413, %v418, 0.0
    %v423 = vsel %vm414, %v418, 0.0
    %v424 = vsel %vm415, %v418, 0.0
    %v425 = vsel %vm416, %v418, 0.0
    %v426 = vsel %vm417, %v418, 0.0
    %v427 = vadd.f32 %v401, %v419
    %v428 = vadd.f32 %v402, %v420
    %v429 = vadd.f32 %v403, %v421
    %v430 = vadd.f32 %v404, %v422
    %v431 = vadd.f32 %v405, %v423
    %v432 = vadd.f32 %v406, %v424
    %v433 = vadd.f32 %v407, %v425
    %v434 = vadd.f32 %v408, %v426
    %vm435 = vcmp.eq.s32.totalorder %v51, 7
    %vm436 = vcmp.eq.s32.totalorder %v52, 7
    %vm437 = vcmp.eq.s32.totalorder %v53, 7
    %vm438 = vcmp.eq.s32.totalorder %v54, 7
    %vm439 = vcmp.eq.s32.totalorder %v55, 7
    %vm440 = vcmp.eq.s32.totalorder %v56, 7
    %vm441 = vcmp.eq.s32.totalorder %v57, 7
    %vm442 = vcmp.eq.s32.totalorder %v58, 7
    %v443 = vsel %vm435, %v418, 0.0
    %v444 = vsel %vm436, %v418, 0.0
    %v445 = vsel %vm437, %v418, 0.0
    %v446 = vsel %vm438, %v418, 0.0
    %v447 = vsel %vm439, %v418, 0.0
    %v448 = vsel %vm440, %v418, 0.0
    %v449 = vsel %vm441, %v418, 0.0
    %v450 = vsel %vm442, %v418, 0.0
    %v451 = vsub.f32 %v427, %v443
    %v452 = vsub.f32 %v428, %v444
    %v453 = vsub.f32 %v429, %v445
    %v454 = vsub.f32 %v430, %v446
    %v455 = vsub.f32 %v431, %v447
    %v456 = vsub.f32 %v432, %v448
    %v457 = vsub.f32 %v433, %v449
    %v458 = vsub.f32 %v434, %v450
    %459 = vst [vmem:[#allocation7] sm:$0xff] %v451
    %460 = vst [vmem:[#allocation7 + $0x8] sm:$0xff] %v452
    %461 = vst [vmem:[#allocation7 + $0x10] sm:$0xff] %v453
    %462 = vst [vmem:[#allocation7 + $0x18] sm:$0xff] %v454
    %463 = vst [vmem:[#allocation7 + $0x20] sm:$0xff] %v455
    %464 = vst [vmem:[#allocation7 + $0x28] sm:$0xff] %v456
    %465 = vst [vmem:[#allocation7 + $0x30] sm:$0xff] %v457
    %466 = vst [vmem:[#allocation7 + $0x38] sm:$0xff] %v458
    // Predicated region
    $region18: #{tpu_custom_call.1} parent=1 // pred_check
      _
    $region19: #{tpu_custom_call.1} parent=1 // pred_check_branch
      %468 = sbr.rel (0) target = $region21
    $region20: #{tpu_custom_call.1} parent=1 // pred_region
      %s470 = ssub.s32 1024, 1024
      %471 = vsyncadd [#allocation4], %s470
      %s473 = sshll.u32 [#allocation7], 4
      %s474 = int_to_ptr.vmem [resolvable:$true] %s473
      %476 = dma.vmem_to_hbm [thread:$0]  %s474, 1024, %s2, [#allocation4]
    $region21: #{tpu_custom_call.1} parent=1 // pred_fallthru
      _
    // Predicated region
    $region22: #{tpu_custom_call.1} parent=1 // pred_check
      _
    $region23: #{tpu_custom_call.1} parent=1 // pred_check_branch
      %478 = sbr.rel (0) target = $region25
    $region24: #{tpu_custom_call.1} parent=1 // pred_region
      %479 = dma.done [#allocation4], 1024
    $region25: #{tpu_custom_call.1} parent=1 // pred_fallthru
      _
    %480 = vsyncpa [#allocation3], 1
    %481 = vsyncpa [#allocation4], 1
    %482 = vsyncpa [#allocation5], 1

</llo_original>
